<compile_context>
chip_gen: v5e
topology: v5e:2x2
jax: 0.10.0
libtpu: 0.0.40
codegen_flags: <defaults>
</compile_context>

<pallas_src>
import functools

import jax
import jax.numpy as jnp
import numpy as np
from jax import lax
from jax.experimental import pallas as pl
from jax.experimental.pallas import tpu as pltpu

# Config (Config.d_model / Config.n_heads / Config.d_ff stand-ins)
D_MODEL = 32
N_HEADS = 4
D_FF = 64
LN_EPS = 1e-5
MASK_BIAS = -3.0e4   # additive key-padding / cross-batch bias (exp() underflows to 0)


def _layer_norm(x, g, b):
    mu = jnp.mean(x, axis=-1, keepdims=True)
    var = jnp.mean((x - mu) ** 2, axis=-1, keepdims=True)
    return (x - mu) * jax.lax.rsqrt(var + LN_EPS) * g + b


def encoder_layer_kernel(q_ref, kv_ref, qcode_ref, wslab_ref, slabb_ref, vec_ref,
                         o_ref, *, n_heads, d_ff):
    f32, bf16 = jnp.float32, jnp.bfloat16
    D = q_ref.shape[-1]
    F = d_ff
    Nk = kv_ref.shape[0]
    HNk = n_heads * Nk

    q = q_ref[...]                                 # (RT, D) f32 (residual path stays f32)
    kv = kv_ref[...]                               # (Nk, D) bf16
    rt = q.shape[0]

    # ---- packed per-feature vectors: one small DMA, static value slices ----
    vec = vec_ref[...]                             # (13, VW) f32
    bq, bk, bv, bo = vec[0:1, :D], vec[1:2, :D], vec[2:3, :D], vec[3:4, :D]
    g1, be1 = vec[4:5, :D], vec[5:6, :D]
    b1 = vec[6:7, :F]
    b2, gf, bff = vec[7:8, :D], vec[8:9, :D], vec[9:10, :D]
    g2, be2 = vec[10:11, :D], vec[11:12, :D]
    kcode = vec[12:13, :HNk]                       # batch id per packed (head,key) lane; -1 = pad

    # ---- weight slabs (bf16, pre-transposed in the wrapper; static ref slices) ----
    wq = wslab_ref[:, 0 * D:1 * D]                 # already carries the 1/sqrt(head_dim) scale
    wk = wslab_ref[:, 1 * D:2 * D]
    wv = wslab_ref[:, 2 * D:3 * D]
    wo = wslab_ref[:, 3 * D:4 * D]
    w1 = wslab_ref[:, 4 * D:4 * D + F]
    w2 = slabb_ref[0:F, :]                         # (F, D)
    head_mask = slabb_ref[F:F + HNk, :]            # (HNk, D) 0/1 head block-diagonal

    # ---- in-projections: bf16 MXU operands, f32 accumulation ----
    qp = jnp.dot(q.astype(bf16), wq, preferred_element_type=f32) + bq    # (RT, D)
    kp = jnp.dot(kv, wk, preferred_element_type=f32) + bk                # (Nk, D)
    vp = jnp.dot(kv, wv, preferred_element_type=f32) + bv                # (Nk, D)

    # ---- head-packed K / V: replicate rows per head, mask to the head block ----
    kpk = jnp.concatenate([kp] * n_heads, axis=0).astype(bf16) * head_mask   # (HNk, D)
    vpk = jnp.concatenate([vp] * n_heads, axis=0).astype(bf16) * head_mask   # (HNk, D)

    # ---- scores for ALL heads in one 2-D MXU matmul (lanes = head*key, K = D) ----
    s = lax.dot_general(qp.astype(bf16), kpk, (((1,), (1,)), ((), ())),
                        preferred_element_type=f32)                     # (RT, HNk)

    # additive bias generated on the fly: cross-batch + padded-key lanes -> MASK_BIAS
    qcode = qcode_ref[...]                                               # (RT, 1)
    attend = (jnp.broadcast_to(qcode, (rt, HNk)) ==
              jnp.broadcast_to(kcode, (rt, HNk)))
    s = s + jnp.where(attend, 0.0, MASK_BIAS)

    # softmax: one per-row stabiliser is valid for every head block (the constant
    # cancels in the normalisation); per-head denominators come from an MXU matmul
    # against the 0/1 head mask (maps key lanes -> feature lanes of the same head).
    s = s - jnp.max(s, axis=-1, keepdims=True)
    p = jnp.exp(s).astype(bf16)                                          # (RT, HNk)
    ctx = jnp.dot(p, vpk, preferred_element_type=f32)                    # (RT, D)
    den = jnp.dot(p, head_mask, preferred_element_type=f32)              # (RT, D)
    ctx = ctx * pl.reciprocal(den, approx=True)

    # ---- out-projection, residual, layer_norm1 ----
    attn = jnp.dot(ctx.astype(bf16), wo, preferred_element_type=f32) + bo
    # TODO(synk): nn.Dropout is treated as identity (eval mode); no stochastic dropout.
    x = _layer_norm(q + attn, g1, be1)

    # ---- PoswiseFeedForwardNet: Conv1d(k=1) -> ReLU -> Conv1d(k=1) -> residual -> LN ----
    h1 = jnp.maximum(jnp.dot(x.astype(bf16), w1, preferred_element_type=f32) + b1, 0.0)
    y = jnp.dot(h1.astype(bf16), w2, preferred_element_type=f32) + b2
    y = _layer_norm(y + x, gf, bff)

    # ---- final layer_norm2 ----
    o_ref[...] = _layer_norm(y, g2, be2)


def encoder_layer(q_inputs, kv_inputs, kv_mask, params, *, n_heads=N_HEADS):
    """q_inputs: (Lq, B, D), kv_inputs: (Lk, B, D), kv_mask: (B, Lk) bool (True = pad)."""
    Lq, B, D = q_inputs.shape
    Lk = kv_inputs.shape[0]
    F = params["w1"].shape[0]
    hd = D // n_heads
    scale = 1.0 / float(hd) ** 0.5
    Nq, Nk = Lq * B, Lk * B
    HNk = n_heads * Nk
    VW = max(D, F, HNk)

    # Activations: free (metadata) reshapes, row order = (seq, batch).  Query rows stay
    # f32 (residual path); kv rows go in as bf16 (only ever used as MXU operands).
    q_flat = q_inputs.astype(jnp.float32).reshape(Nq, D)
    kv_flat = kv_inputs.astype(jnp.bfloat16).reshape(Nk, D)

    # Batch-code column per packed query row, and batch-code per packed (head, key) lane
    # with padded keys coded -1 (never equal to any batch id) -> one compare builds the
    # full cross-batch + padding additive bias inside the kernel.
    q_code = jnp.tile(jnp.arange(B, dtype=jnp.float32), Lq).reshape(Nq, 1)
    k_bid = jnp.tile(jnp.arange(B, dtype=jnp.float32), Lk)
    k_pad = jnp.transpose(kv_mask).reshape(Nk)
    k_code = jnp.tile(jnp.where(k_pad, -1.0, k_bid), n_heads)            # (HNk,)

    # Weight slab (bf16): [Wq*scale | Wk | Wv | Wo | W1], all pre-transposed to (D, out).
    w_slab = jnp.concatenate(
        [params["wq"].T * scale, params["wk"].T, params["wv"].T,
         params["wo"].T, params["w1"].T], axis=1).astype(jnp.bfloat16)   # (D, 4D+F)

    # Second slab (bf16): [W2^T ; head block-diagonal 0/1 mask].
    head_of_row = jnp.repeat(jnp.arange(n_heads), Nk)                    # (HNk,)
    head_of_col = jnp.repeat(jnp.arange(n_heads), hd)                    # (D,)
    head_mask = (head_of_row[:, None] == head_of_col[None, :]).astype(jnp.bfloat16)
    slab_b = jnp.concatenate(
        [params["w2"].T.astype(jnp.bfloat16), head_mask], axis=0)        # (F+HNk, D)

    # Packed small f32 vectors: biases, LayerNorm params, b1 and the key-code row.
    def pad_row(v):
        v = jnp.asarray(v, jnp.float32).reshape(1, -1)
        return jnp.pad(v, ((0, 0), (0, VW - v.shape[1])))

    vec = jnp.concatenate([
        pad_row(params["bq"] * scale), pad_row(params["bk"]), pad_row(params["bv"]),
        pad_row(params["bo"]),
        pad_row(params["g1"]), pad_row(params["be1"]),
        pad_row(params["b1"]),
        pad_row(params["b2"]), pad_row(params["gf"]), pad_row(params["bf"]),
        pad_row(params["g2"]), pad_row(params["be2"]),
        pad_row(k_code),
    ], axis=0)                                                           # (13, VW)

    # One grid step per query-row tile.  At these toy sizes a single step covers
    # everything; at production sizes the row axis tiles VMEM and (being "parallel")
    # shards across v7x's two TensorCores.  Weights / kv stay resident across steps.
    row_tile = Nq
    for cand in (512, 256, 128):
        if Nq > cand and Nq % cand == 0:
            row_tile = cand
            break
    grid = (Nq // row_tile,)

    kernel = functools.partial(encoder_layer_kernel, n_heads=n_heads, d_ff=F)

    out = pl.pallas_call(
        kernel,
        out_shape=jax.ShapeDtypeStruct((Nq, D), jnp.float32),
        grid_spec=pltpu.PrefetchScalarGridSpec(
            num_scalar_prefetch=0,
            grid=grid,
            in_specs=[
                pl.BlockSpec((row_tile, D), lambda i: (i, 0)),    # query rows (tiled)
                pl.BlockSpec((Nk, D), lambda i: (0, 0)),          # kv rows (resident)
                pl.BlockSpec((row_tile, 1), lambda i: (i, 0)),    # query batch codes
                pl.BlockSpec(w_slab.shape, lambda i: (0, 0)),     # weight slab
                pl.BlockSpec(slab_b.shape, lambda i: (0, 0)),     # W2 + head mask
                pl.BlockSpec(vec.shape, lambda i: (0, 0)),        # packed vectors
            ],
            out_specs=pl.BlockSpec((row_tile, D), lambda i: (i, 0)),
        ),
        compiler_params=pltpu.CompilerParams(
            dimension_semantics=("parallel",)),
    )(q_flat, kv_flat, q_code, w_slab, slab_b, vec)

    return out.reshape(Lq, B, D)        # free metadata reshape back to seq-first


def reference(q_inputs, kv_inputs, kv_mask, params, n_heads=N_HEADS):
    """Pure-JAX f32 reference of the same forward pass (for verification)."""
    q = jnp.transpose(q_inputs, (1, 0, 2)).astype(jnp.float32)    # (B, Lq, D)
    kv = jnp.transpose(kv_inputs, (1, 0, 2)).astype(jnp.float32)  # (B, Lk, D)
    B, Lq, D = q.shape
    Lk = kv.shape[1]
    hd = D // n_heads

    qp = q @ params["wq"].T + params["bq"]
    kp = kv @ params["wk"].T + params["bk"]
    vp = kv @ params["wv"].T + params["bv"]

    def heads(x, L):
        return x.reshape(B, L, n_heads, hd).transpose(0, 2, 1, 3)

    qh, kh, vh = heads(qp, Lq), heads(kp, Lk), heads(vp, Lk)
    s = jnp.einsum("bhqd,bhkd->bhqk", qh, kh) / jnp.sqrt(float(hd))
    s = s + jnp.where(kv_mask, MASK_BIAS, 0.0)[:, None, None, :]
    p = jax.nn.softmax(s, axis=-1)
    ctx = jnp.einsum("bhqk,bhkd->bhqd", p, vh).transpose(0, 2, 1, 3).reshape(B, Lq, D)
    attn = ctx @ params["wo"].T + params["bo"]

    def ln(x, g, b):
        mu = x.mean(-1, keepdims=True)
        var = ((x - mu) ** 2).mean(-1, keepdims=True)
        return (x - mu) * jax.lax.rsqrt(var + LN_EPS) * g + b

    x = ln(q + attn, params["g1"], params["be1"])
    h1 = jax.nn.relu(x @ params["w1"].T + params["b1"])
    y = h1 @ params["w2"].T + params["b2"]
    y = ln(y + x, params["gf"], params["bf"])
    y = ln(y, params["g2"], params["be2"])
    return jnp.transpose(y, (1, 0, 2))


if __name__ == "__main__":
    B, Lq, Lk = 2, 8, 8
    D, H, F = D_MODEL, N_HEADS, D_FF

    key = jax.random.PRNGKey(0)
    keys = jax.random.split(key, 16)

    q_inputs = jax.random.normal(keys[0], (Lq, B, D), jnp.float32)
    kv_inputs = jax.random.normal(keys[1], (Lk, B, D), jnp.float32)
    # key_padding_mask: True = ignore this key position.
    kv_mask = jnp.array(
        [[False] * Lk,
         [False] * (Lk - 3) + [True] * 3])

    def w(k, shape, s=0.1):
        return jax.random.normal(k, shape, jnp.float32) * s

    params = dict(
        # MultiheadAttention in_proj (split into q/k/v) and out_proj
        wq=w(keys[2], (D, D)), wk=w(keys[3], (D, D)), wv=w(keys[4], (D, D)),
        bq=w(keys[5], (1, D)), bk=w(keys[6], (1, D)), bv=w(keys[7], (1, D)),
        wo=w(keys[8], (D, D)), bo=w(keys[9], (1, D)),
        # layer_norm1
        g1=jnp.ones((1, D), jnp.float32), be1=jnp.zeros((1, D), jnp.float32),
        # PoswiseFeedForwardNet: conv1 (d_ff, D, 1) -> (d_ff, D); conv2 (D, d_ff, 1) -> (D, d_ff)
        w1=w(keys[10], (F, D)), b1=w(keys[11], (1, F)),
        w2=w(keys[12], (D, F)), b2=w(keys[13], (1, D)),
        # pos_ffn.layer_norm
        gf=jnp.ones((1, D), jnp.float32), bf=jnp.zeros((1, D), jnp.float32),
        # layer_norm2
        g2=jnp.ones((1, D), jnp.float32), be2=jnp.zeros((1, D), jnp.float32),
    )

    out = encoder_layer(q_inputs, kv_inputs, kv_mask, params)
    out = jax.block_until_ready(out)
    assert out.shape == (Lq, B, D)

    ref = jax.block_until_ready(reference(q_inputs, kv_inputs, kv_mask, params))
    # bf16 MXU operands (f32 accumulation / f32 LayerNorm & softmax stats) introduce
    # ~2^-9 relative rounding per matmul operand, hence the 2e-2 tolerance vs the
    # f32 reference.
    np.testing.assert_allclose(np.asarray(out), np.asarray(ref), atol=2e-2, rtol=2e-2)

    print("KERNEL_OK")
</pallas_src>

<mosaic_0001>
module attributes {stable_mosaic.version = 11 : i64} {
  func.func @encoder_layer_kernel(%arg0: i32, %arg1: memref<16x32xf32, #tpu.memory_space<vmem>>, %arg2: memref<16x32xbf16, #tpu.memory_space<vmem>>, %arg3: memref<16x1xf32, #tpu.memory_space<vmem>>, %arg4: memref<32x192xbf16, #tpu.memory_space<vmem>>, %arg5: memref<128x32xbf16, #tpu.memory_space<vmem>>, %arg6: memref<13x64xf32, #tpu.memory_space<vmem>>, %arg7: memref<16x32xf32, #tpu.memory_space<vmem>>) attributes {dimension_semantics = [#tpu.dimension_semantics<parallel>], iteration_bounds = array<i64: 1>, scalar_prefetch = 0 : i64, scratch_operands = 0 : i64, tpu.core_type = #tpu.core_type<tc>, window_params = [{transform_indices = @transform_0, window_bounds = array<i64: 16, 32>}, {pipeline_mode = #tpu.pipeline_mode<synchronous>, transform_indices = @transform_1, window_bounds = array<i64: 16, 32>}, {transform_indices = @transform_2, window_bounds = array<i64: 16, 1>}, {pipeline_mode = #tpu.pipeline_mode<synchronous>, transform_indices = @transform_3, window_bounds = array<i64: 32, 192>}, {pipeline_mode = #tpu.pipeline_mode<synchronous>, transform_indices = @transform_4, window_bounds = array<i64: 128, 32>}, {pipeline_mode = #tpu.pipeline_mode<synchronous>, transform_indices = @transform_5, window_bounds = array<i64: 13, 64>}, {transform_indices = @transform_6, window_bounds = array<i64: 16, 32>}]} {
    %c0 = arith.constant 0 : index
    %c0_0 = arith.constant 0 : index
    %0 = vector.load %arg1[%c0, %c0_0] : memref<16x32xf32, #tpu.memory_space<vmem>>, vector<16x32xf32>
    %c0_1 = arith.constant 0 : index
    %c0_2 = arith.constant 0 : index
    %1 = vector.load %arg2[%c0_1, %c0_2] : memref<16x32xbf16, #tpu.memory_space<vmem>>, vector<16x32xbf16>
    %c0_3 = arith.constant 0 : index
    %c0_4 = arith.constant 0 : index
    %2 = vector.load %arg6[%c0_3, %c0_4] : memref<13x64xf32, #tpu.memory_space<vmem>>, vector<13x64xf32>
    %3 = vector.extract_strided_slice %2 {offsets = [0, 0], sizes = [1, 32], strides = [1, 1]} : vector<13x64xf32> to vector<1x32xf32>
    %4 = vector.extract_strided_slice %2 {offsets = [1, 0], sizes = [1, 32], strides = [1, 1]} : vector<13x64xf32> to vector<1x32xf32>
    %5 = vector.extract_strided_slice %2 {offsets = [2, 0], sizes = [1, 32], strides = [1, 1]} : vector<13x64xf32> to vector<1x32xf32>
    %6 = vector.extract_strided_slice %2 {offsets = [3, 0], sizes = [1, 32], strides = [1, 1]} : vector<13x64xf32> to vector<1x32xf32>
    %7 = vector.extract_strided_slice %2 {offsets = [4, 0], sizes = [1, 32], strides = [1, 1]} : vector<13x64xf32> to vector<1x32xf32>
    %8 = vector.extract_strided_slice %2 {offsets = [5, 0], sizes = [1, 32], strides = [1, 1]} : vector<13x64xf32> to vector<1x32xf32>
    %9 = vector.extract_strided_slice %2 {offsets = [6, 0], sizes = [1, 64], strides = [1, 1]} : vector<13x64xf32> to vector<1x64xf32>
    %10 = vector.extract_strided_slice %2 {offsets = [7, 0], sizes = [1, 32], strides = [1, 1]} : vector<13x64xf32> to vector<1x32xf32>
    %11 = vector.extract_strided_slice %2 {offsets = [8, 0], sizes = [1, 32], strides = [1, 1]} : vector<13x64xf32> to vector<1x32xf32>
    %12 = vector.extract_strided_slice %2 {offsets = [9, 0], sizes = [1, 32], strides = [1, 1]} : vector<13x64xf32> to vector<1x32xf32>
    %13 = vector.extract_strided_slice %2 {offsets = [10, 0], sizes = [1, 32], strides = [1, 1]} : vector<13x64xf32> to vector<1x32xf32>
    %14 = vector.extract_strided_slice %2 {offsets = [11, 0], sizes = [1, 32], strides = [1, 1]} : vector<13x64xf32> to vector<1x32xf32>
    %15 = vector.extract_strided_slice %2 {offsets = [12, 0], sizes = [1, 64], strides = [1, 1]} : vector<13x64xf32> to vector<1x64xf32>
    %c0_5 = arith.constant 0 : index
    %c0_6 = arith.constant 0 : index
    %16 = vector.load %arg4[%c0_5, %c0_6] : memref<32x192xbf16, #tpu.memory_space<vmem>>, vector<32x32xbf16>
    %c0_7 = arith.constant 0 : index
    %c32 = arith.constant 32 : index
    %17 = vector.load %arg4[%c0_7, %c32] : memref<32x192xbf16, #tpu.memory_space<vmem>>, vector<32x32xbf16>
    %c0_8 = arith.constant 0 : index
    %c64 = arith.constant 64 : index
    %18 = vector.load %arg4[%c0_8, %c64] : memref<32x192xbf16, #tpu.memory_space<vmem>>, vector<32x32xbf16>
    %c0_9 = arith.constant 0 : index
    %c96 = arith.constant 96 : index
    %19 = vector.load %arg4[%c0_9, %c96] : memref<32x192xbf16, #tpu.memory_space<vmem>>, vector<32x32xbf16>
    %c0_10 = arith.constant 0 : index
    %c128 = arith.constant 128 : index
    %20 = vector.load %arg4[%c0_10, %c128] : memref<32x192xbf16, #tpu.memory_space<vmem>>, vector<32x64xbf16>
    %c0_11 = arith.constant 0 : index
    %c0_12 = arith.constant 0 : index
    %21 = vector.load %arg5[%c0_11, %c0_12] : memref<128x32xbf16, #tpu.memory_space<vmem>>, vector<64x32xbf16>
    %c64_13 = arith.constant 64 : index
    %c0_14 = arith.constant 0 : index
    %22 = vector.load %arg5[%c64_13, %c0_14] : memref<128x32xbf16, #tpu.memory_space<vmem>>, vector<64x32xbf16>
    %23 = arith.truncf %0 : vector<16x32xf32> to vector<16x32xbf16>
    %cst = arith.constant dense<0.000000e+00> : vector<16x32xf32>
    %24 = tpu.matmul %23, %16, %cst {dimension_numbers = #tpu.dot_dimension_numbers<[1], [0], [0], [1], [0, 0, 1, 1], [], []>} : vector<16x32xbf16>, vector<32x32xbf16>, vector<16x32xf32> -> vector<16x32xf32>
    %25 = vector.broadcast %3 : vector<1x32xf32> to vector<16x32xf32>
    %26 = arith.addf %24, %25 : vector<16x32xf32>
    %cst_15 = arith.constant dense<0.000000e+00> : vector<16x32xf32>
    %27 = tpu.matmul %1, %17, %cst_15 {dimension_numbers = #tpu.dot_dimension_numbers<[1], [0], [0], [1], [0, 0, 1, 1], [], []>} : vector<16x32xbf16>, vector<32x32xbf16>, vector<16x32xf32> -> vector<16x32xf32>
    %28 = vector.broadcast %4 : vector<1x32xf32> to vector<16x32xf32>
    %29 = arith.addf %27, %28 : vector<16x32xf32>
    %cst_16 = arith.constant dense<0.000000e+00> : vector<16x32xf32>
    %30 = tpu.matmul %1, %18, %cst_16 {dimension_numbers = #tpu.dot_dimension_numbers<[1], [0], [0], [1], [0, 0, 1, 1], [], []>} : vector<16x32xbf16>, vector<32x32xbf16>, vector<16x32xf32> -> vector<16x32xf32>
    %31 = vector.broadcast %5 : vector<1x32xf32> to vector<16x32xf32>
    %32 = arith.addf %30, %31 : vector<16x32xf32>
    %33 = tpu.concatenate %29, %29, %29, %29 in 0 : vector<16x32xf32>, vector<16x32xf32>, vector<16x32xf32>, vector<16x32xf32> -> vector<64x32xf32>
    %34 = arith.truncf %33 : vector<64x32xf32> to vector<64x32xbf16>
    %35 = arith.mulf %34, %22 : vector<64x32xbf16>
    %36 = tpu.concatenate %32, %32, %32, %32 in 0 : vector<16x32xf32>, vector<16x32xf32>, vector<16x32xf32>, vector<16x32xf32> -> vector<64x32xf32>
    %37 = arith.truncf %36 : vector<64x32xf32> to vector<64x32xbf16>
    %38 = arith.mulf %37, %22 : vector<64x32xbf16>
    %39 = arith.truncf %26 : vector<16x32xf32> to vector<16x32xbf16>
    %cst_17 = arith.constant dense<0.000000e+00> : vector<16x64xf32>
    %40 = tpu.matmul %39, %35, %cst_17 {dimension_numbers = #tpu.dot_dimension_numbers<[1], [1], [0], [0], [0, 0, 1, 0], [], []>} : vector<16x32xbf16>, vector<64x32xbf16>, vector<16x64xf32> -> vector<16x64xf32>
    %c0_18 = arith.constant 0 : index
    %c0_19 = arith.constant 0 : index
    %41 = vector.load %arg3[%c0_18, %c0_19] : memref<16x1xf32, #tpu.memory_space<vmem>>, vector<16x1xf32>
    %42 = vector.shape_cast %41 : vector<16x1xf32> to vector<16x1xf32>
    %43 = vector.broadcast %42 : vector<16x1xf32> to vector<16x64xf32>
    %44 = vector.shape_cast %15 : vector<1x64xf32> to vector<1x64xf32>
    %45 = vector.broadcast %44 : vector<1x64xf32> to vector<16x64xf32>
    %46 = arith.cmpf oeq, %43, %45 : vector<16x64xf32>
    %cst_20 = arith.constant 0.000000e+00 : f32
    %cst_21 = arith.constant -3.000000e+04 : f32
    %47 = vector.broadcast %cst_20 : f32 to vector<16x64xf32>
    %48 = vector.broadcast %cst_21 : f32 to vector<16x64xf32>
    %49 = arith.select %46, %47, %48 : vector<16x64xi1>, vector<16x64xf32>
    %50 = arith.addf %40, %49 : vector<16x64xf32>
    %cst_22 = arith.constant dense<0xFF800000> : vector<16xf32>
    %51 = vector.multi_reduction <maximumf>, %50, %cst_22 [1] : vector<16x64xf32> to vector<16xf32>
    %52 = vector.shape_cast %51 : vector<16xf32> to vector<16x1xf32>
    %53 = vector.broadcast %52 : vector<16x1xf32> to vector<16x64xf32>
    %54 = arith.subf %50, %53 : vector<16x64xf32>
    %55 = math.exp %54 : vector<16x64xf32>
    %56 = arith.truncf %55 : vector<16x64xf32> to vector<16x64xbf16>
    %cst_23 = arith.constant dense<0.000000e+00> : vector<16x32xf32>
    %57 = tpu.matmul %56, %38, %cst_23 {dimension_numbers = #tpu.dot_dimension_numbers<[1], [0], [0], [1], [0, 0, 1, 1], [], []>} : vector<16x64xbf16>, vector<64x32xbf16>, vector<16x32xf32> -> vector<16x32xf32>
    %cst_24 = arith.constant dense<0.000000e+00> : vector<16x32xf32>
    %58 = tpu.matmul %56, %22, %cst_24 {dimension_numbers = #tpu.dot_dimension_numbers<[1], [0], [0], [1], [0, 0, 1, 1], [], []>} : vector<16x64xbf16>, vector<64x32xbf16>, vector<16x32xf32> -> vector<16x32xf32>
    %59 = tpu.reciprocal %58 {approx = true} : vector<16x32xf32> -> vector<16x32xf32>
    %60 = arith.mulf %57, %59 : vector<16x32xf32>
    %61 = arith.truncf %60 : vector<16x32xf32> to vector<16x32xbf16>
    %cst_25 = arith.constant dense<0.000000e+00> : vector<16x32xf32>
    %62 = tpu.matmul %61, %19, %cst_25 {dimension_numbers = #tpu.dot_dimension_numbers<[1], [0], [0], [1], [0, 0, 1, 1], [], []>} : vector<16x32xbf16>, vector<32x32xbf16>, vector<16x32xf32> -> vector<16x32xf32>
    %63 = vector.broadcast %6 : vector<1x32xf32> to vector<16x32xf32>
    %64 = arith.addf %62, %63 : vector<16x32xf32>
    %65 = arith.addf %0, %64 : vector<16x32xf32>
    %cst_26 = arith.constant dense<0.000000e+00> : vector<16xf32>
    %66 = vector.multi_reduction <add>, %65, %cst_26 [1] : vector<16x32xf32> to vector<16xf32>
    %67 = vector.shape_cast %66 : vector<16xf32> to vector<16x1xf32>
    %cst_27 = arith.constant 3.200000e+01 : f32
    %68 = vector.broadcast %cst_27 : f32 to vector<16x1xf32>
    %69 = arith.divf %67, %68 : vector<16x1xf32>
    %70 = vector.broadcast %69 : vector<16x1xf32> to vector<16x32xf32>
    %71 = arith.subf %65, %70 : vector<16x32xf32>
    %72 = arith.mulf %71, %71 : vector<16x32xf32>
    %cst_28 = arith.constant dense<0.000000e+00> : vector<16xf32>
    %73 = vector.multi_reduction <add>, %72, %cst_28 [1] : vector<16x32xf32> to vector<16xf32>
    %74 = vector.shape_cast %73 : vector<16xf32> to vector<16x1xf32>
    %cst_29 = arith.constant 3.200000e+01 : f32
    %75 = vector.broadcast %cst_29 : f32 to vector<16x1xf32>
    %76 = arith.divf %74, %75 : vector<16x1xf32>
    %77 = vector.broadcast %69 : vector<16x1xf32> to vector<16x32xf32>
    %78 = arith.subf %65, %77 : vector<16x32xf32>
    %cst_30 = arith.constant 9.99999974E-6 : f32
    %79 = vector.broadcast %cst_30 : f32 to vector<16x1xf32>
    %80 = arith.addf %76, %79 : vector<16x1xf32>
    %81 = math.rsqrt %80 : vector<16x1xf32>
    %82 = vector.broadcast %81 : vector<16x1xf32> to vector<16x32xf32>
    %83 = arith.mulf %78, %82 : vector<16x32xf32>
    %84 = vector.broadcast %7 : vector<1x32xf32> to vector<16x32xf32>
    %85 = arith.mulf %83, %84 : vector<16x32xf32>
    %86 = vector.broadcast %8 : vector<1x32xf32> to vector<16x32xf32>
    %87 = arith.addf %85, %86 : vector<16x32xf32>
    %88 = arith.truncf %87 : vector<16x32xf32> to vector<16x32xbf16>
    %cst_31 = arith.constant dense<0.000000e+00> : vector<16x64xf32>
    %89 = tpu.matmul %88, %20, %cst_31 {dimension_numbers = #tpu.dot_dimension_numbers<[1], [0], [0], [1], [0, 0, 1, 1], [], []>} : vector<16x32xbf16>, vector<32x64xbf16>, vector<16x64xf32> -> vector<16x64xf32>
    %90 = vector.broadcast %9 : vector<1x64xf32> to vector<16x64xf32>
    %91 = arith.addf %89, %90 : vector<16x64xf32>
    %cst_32 = arith.constant 0.000000e+00 : f32
    %92 = vector.broadcast %cst_32 : f32 to vector<16x64xf32>
    %93 = arith.maximumf %91, %92 : vector<16x64xf32>
    %94 = arith.truncf %93 : vector<16x64xf32> to vector<16x64xbf16>
    %cst_33 = arith.constant dense<0.000000e+00> : vector<16x32xf32>
    %95 = tpu.matmul %94, %21, %cst_33 {dimension_numbers = #tpu.dot_dimension_numbers<[1], [0], [0], [1], [0, 0, 1, 1], [], []>} : vector<16x64xbf16>, vector<64x32xbf16>, vector<16x32xf32> -> vector<16x32xf32>
    %96 = vector.broadcast %10 : vector<1x32xf32> to vector<16x32xf32>
    %97 = arith.addf %95, %96 : vector<16x32xf32>
    %98 = arith.addf %97, %87 : vector<16x32xf32>
    %cst_34 = arith.constant dense<0.000000e+00> : vector<16xf32>
    %99 = vector.multi_reduction <add>, %98, %cst_34 [1] : vector<16x32xf32> to vector<16xf32>
    %100 = vector.shape_cast %99 : vector<16xf32> to vector<16x1xf32>
    %cst_35 = arith.constant 3.200000e+01 : f32
    %101 = vector.broadcast %cst_35 : f32 to vector<16x1xf32>
    %102 = arith.divf %100, %101 : vector<16x1xf32>
    %103 = vector.broadcast %102 : vector<16x1xf32> to vector<16x32xf32>
    %104 = arith.subf %98, %103 : vector<16x32xf32>
    %105 = arith.mulf %104, %104 : vector<16x32xf32>
    %cst_36 = arith.constant dense<0.000000e+00> : vector<16xf32>
    %106 = vector.multi_reduction <add>, %105, %cst_36 [1] : vector<16x32xf32> to vector<16xf32>
    %107 = vector.shape_cast %106 : vector<16xf32> to vector<16x1xf32>
    %cst_37 = arith.constant 3.200000e+01 : f32
    %108 = vector.broadcast %cst_37 : f32 to vector<16x1xf32>
    %109 = arith.divf %107, %108 : vector<16x1xf32>
    %110 = vector.broadcast %102 : vector<16x1xf32> to vector<16x32xf32>
    %111 = arith.subf %98, %110 : vector<16x32xf32>
    %cst_38 = arith.constant 9.99999974E-6 : f32
    %112 = vector.broadcast %cst_38 : f32 to vector<16x1xf32>
    %113 = arith.addf %109, %112 : vector<16x1xf32>
    %114 = math.rsqrt %113 : vector<16x1xf32>
    %115 = vector.broadcast %114 : vector<16x1xf32> to vector<16x32xf32>
    %116 = arith.mulf %111, %115 : vector<16x32xf32>
    %117 = vector.broadcast %11 : vector<1x32xf32> to vector<16x32xf32>
    %118 = arith.mulf %116, %117 : vector<16x32xf32>
    %119 = vector.broadcast %12 : vector<1x32xf32> to vector<16x32xf32>
    %120 = arith.addf %118, %119 : vector<16x32xf32>
    %cst_39 = arith.constant dense<0.000000e+00> : vector<16xf32>
    %121 = vector.multi_reduction <add>, %120, %cst_39 [1] : vector<16x32xf32> to vector<16xf32>
    %122 = vector.shape_cast %121 : vector<16xf32> to vector<16x1xf32>
    %cst_40 = arith.constant 3.200000e+01 : f32
    %123 = vector.broadcast %cst_40 : f32 to vector<16x1xf32>
    %124 = arith.divf %122, %123 : vector<16x1xf32>
    %125 = vector.broadcast %124 : vector<16x1xf32> to vector<16x32xf32>
    %126 = arith.subf %120, %125 : vector<16x32xf32>
    %127 = arith.mulf %126, %126 : vector<16x32xf32>
    %cst_41 = arith.constant dense<0.000000e+00> : vector<16xf32>
    %128 = vector.multi_reduction <add>, %127, %cst_41 [1] : vector<16x32xf32> to vector<16xf32>
    %129 = vector.shape_cast %128 : vector<16xf32> to vector<16x1xf32>
    %cst_42 = arith.constant 3.200000e+01 : f32
    %130 = vector.broadcast %cst_42 : f32 to vector<16x1xf32>
    %131 = arith.divf %129, %130 : vector<16x1xf32>
    %132 = vector.broadcast %124 : vector<16x1xf32> to vector<16x32xf32>
    %133 = arith.subf %120, %132 : vector<16x32xf32>
    %cst_43 = arith.constant 9.99999974E-6 : f32
    %134 = vector.broadcast %cst_43 : f32 to vector<16x1xf32>
    %135 = arith.addf %131, %134 : vector<16x1xf32>
    %136 = math.rsqrt %135 : vector<16x1xf32>
    %137 = vector.broadcast %136 : vector<16x1xf32> to vector<16x32xf32>
    %138 = arith.mulf %133, %137 : vector<16x32xf32>
    %139 = vector.broadcast %13 : vector<1x32xf32> to vector<16x32xf32>
    %140 = arith.mulf %138, %139 : vector<16x32xf32>
    %141 = vector.broadcast %14 : vector<1x32xf32> to vector<16x32xf32>
    %142 = arith.addf %140, %141 : vector<16x32xf32>
    %c0_44 = arith.constant 0 : index
    %c0_45 = arith.constant 0 : index
    %143 = vector.load %arg7[%c0_44, %c0_45] : memref<16x32xf32, #tpu.memory_space<vmem>>, vector<16x32xf32>
    tpu.vector_store %arg7[%c0_44, %c0_45], %142 {strides = array<i32>} : memref<16x32xf32, #tpu.memory_space<vmem>>, vector<16x32xf32>,
    return
  }
  func.func @transform_0(%arg0: i32) -> (i32, i32) {
    %c0_i32 = arith.constant 0 : i32
    %c0_i32_0 = arith.constant 0 : i32
    return %arg0, %c0_i32 : i32, i32
  }
  func.func @transform_1(%arg0: i32) -> (i32, i32) {
    %c0_i32 = arith.constant 0 : i32
    %c0_i32_0 = arith.constant 0 : i32
    %c0_i32_1 = arith.constant 0 : i32
    return %c0_i32, %c0_i32_0 : i32, i32
  }
  func.func @transform_2(%arg0: i32) -> (i32, i32) {
    %c0_i32 = arith.constant 0 : i32
    %c0_i32_0 = arith.constant 0 : i32
    return %arg0, %c0_i32 : i32, i32
  }
  func.func @transform_3(%arg0: i32) -> (i32, i32) {
    %c0_i32 = arith.constant 0 : i32
    %c0_i32_0 = arith.constant 0 : i32
    %c0_i32_1 = arith.constant 0 : i32
    return %c0_i32, %c0_i32_0 : i32, i32
  }
  func.func @transform_4(%arg0: i32) -> (i32, i32) {
    %c0_i32 = arith.constant 0 : i32
    %c0_i32_0 = arith.constant 0 : i32
    %c0_i32_1 = arith.constant 0 : i32
    return %c0_i32, %c0_i32_0 : i32, i32
  }
  func.func @transform_5(%arg0: i32) -> (i32, i32) {
    %c0_i32 = arith.constant 0 : i32
    %c0_i32_0 = arith.constant 0 : i32
    %c0_i32_1 = arith.constant 0 : i32
    return %c0_i32, %c0_i32_0 : i32, i32
  }
  func.func @transform_6(%arg0: i32) -> (i32, i32) {
    %c0_i32 = arith.constant 0 : i32
    %c0_i32_0 = arith.constant 0 : i32
    return %arg0, %c0_i32 : i32, i32
  }
}

</mosaic_0001>

<llo_original>
// kernel: tpu_custom_call.1
$region0: #{tpu_custom_call.1}
  #allocation0 [shape = 'u32[]', space=smem, size = 0x4, offset = 0x4, fixed_abs, tag = 'smem constant byte address 0x4 - core index']
  #allocation1 [shape = 'u32[72,128]{1,0:T(1,128)}', space=vmem, size = 0x9000, scoped, tag = 'internal scratch']
  %s0 = inlined_call_operand.vmem [shape: f32[16,32], index: 0, kind: input, shape index: {}]
  %s1 = inlined_call_operand.vmem [shape: bf16[16,32], index: 1, kind: input, shape index: {}]
  %s2 = inlined_call_operand.vmem [shape: f32[16,1], index: 2, kind: input, shape index: {}]
  %s3 = inlined_call_operand.vmem [shape: bf16[32,192], index: 3, kind: input, shape index: {}]
  %s4 = inlined_call_operand.vmem [shape: bf16[128,32], index: 4, kind: input, shape index: {}]
  %s5 = inlined_call_operand.vmem [shape: f32[13,64], index: 5, kind: input, shape index: {}]
  %s6 = inlined_call_operand.hbm [shape: f32[16,32], index: 6, kind: output, shape index: {}]
  %s7 = sld [smem:[#allocation0]]
  $region34: #{tpu_custom_call.1} parent=0
    _
  %s9 = ssub.s32 1, %s7
  %s10 = scalar_select 0, %s9, %s7
  $region1: #{tpu_custom_call.1} parent=0
    #allocation2 [shape = 'u8[8192]{0}', space=vmem, size = 0x2000, scoped, tag = 'output window, operand 0, single buffered']
    #allocation3 [shape = 's32[1]{0}', space=sflag, size = 0x4, scoped, tag = 'scoped memory for tpu_custom_call.1']
    %11 = vsyncpa [#allocation3], 0
    // Predicated region
    $region2: #{tpu_custom_call.1} parent=1 // pred_check
      _
    $region3: #{tpu_custom_call.1} parent=1 // pred_check_branch
      %13 = sbr.rel (0) target = $region5
    $region4: #{tpu_custom_call.1} parent=1 // pred_region
      _
    $region5: #{tpu_custom_call.1} parent=1 // pred_fallthru
      _
    // Predicated region
    $region6: #{tpu_custom_call.1} parent=1 // pred_check
      _
    $region7: #{tpu_custom_call.1} parent=1 // pred_check_branch
      %15 = sbr.rel (0) target = $region9
    $region8: #{tpu_custom_call.1} parent=1 // pred_region
      _
    $region9: #{tpu_custom_call.1} parent=1 // pred_fallthru
      _
    // Predicated region
    $region10: #{tpu_custom_call.1} parent=1 // pred_check
      _
    $region11: #{tpu_custom_call.1} parent=1 // pred_check_branch
      %17 = sbr.rel (0) target = $region13
    $region12: #{tpu_custom_call.1} parent=1 // pred_region
      _
    $region13: #{tpu_custom_call.1} parent=1 // pred_fallthru
      _
    // Predicated region
    $region14: #{tpu_custom_call.1} parent=1 // pred_check
      _
    $region15: #{tpu_custom_call.1} parent=1 // pred_check_branch
      %19 = sbr.rel (0) target = $region17
    $region16: #{tpu_custom_call.1} parent=1 // pred_region
      _
    $region17: #{tpu_custom_call.1} parent=1 // pred_fallthru
      _
    // Predicated region
    $region18: #{tpu_custom_call.1} parent=1 // pred_check
      _
    $region19: #{tpu_custom_call.1} parent=1 // pred_check_branch
      %21 = sbr.rel (0) target = $region21
    $region20: #{tpu_custom_call.1} parent=1 // pred_region
      _
    $region21: #{tpu_custom_call.1} parent=1 // pred_fallthru
      _
    // Predicated region
    $region22: #{tpu_custom_call.1} parent=1 // pred_check
      _
    $region23: #{tpu_custom_call.1} parent=1 // pred_check_branch
      %23 = sbr.rel (0) target = $region25
    $region24: #{tpu_custom_call.1} parent=1 // pred_region
      _
    $region25: #{tpu_custom_call.1} parent=1 // pred_fallthru
      _
    %v25 = vld [vmem:[%s0] sm:$0xff]
    %v26 = vld [vmem:[%s0 + $0x8] sm:$0xff]
    %v27 = vld [vmem:[%s1] sm:$0xf]
    %v28 = vld [vmem:[%s1 + $0x4] sm:$0xf]
    %v29 = vld [vmem:[%s5] sm:$0xff]
    %v30 = vld [vmem:[%s5 + $0x8] sm:$0x1f]
    %v31 = vld [vmem:[%s3] sm:$0xf]
    %v32 = vld [vmem:[%s3 + $0x8] sm:$0xf]
    %v33 = vld [vmem:[%s3 + $0x10] sm:$0xf]
    %v34 = vld [vmem:[%s3 + $0x18] sm:$0xf]
    %v35 = vld [vmem:[%s3 + $0x4] sm:$0xf]
    %v36 = vld [vmem:[%s3 + $0xc] sm:$0xf]
    %v37 = vld [vmem:[%s3 + $0x14] sm:$0xf]
    %v38 = vld [vmem:[%s3 + $0x1c] sm:$0xf]
    %v39 = vld [vmem:[%s4] sm:$0xf]
    %v40 = vld [vmem:[%s4 + $0x4] sm:$0xf]
    %v41 = vld [vmem:[%s4 + $0x8] sm:$0xf]
    %v42 = vld [vmem:[%s4 + $0xc] sm:$0xf]
    %v43 = vld [vmem:[%s4 + $0x10] sm:$0xf]
    %v44 = vld [vmem:[%s4 + $0x14] sm:$0xf]
    %v45 = vld [vmem:[%s4 + $0x18] sm:$0xf]
    %v46 = vld [vmem:[%s4 + $0x1c] sm:$0xf]
    %v47 = vld [vmem:[%s4 + $0x20] sm:$0xf]
    %v48 = vld [vmem:[%s4 + $0x24] sm:$0xf]
    %v49 = vld [vmem:[%s4 + $0x28] sm:$0xf]
    %v50 = vld [vmem:[%s4 + $0x2c] sm:$0xf]
    %v51 = vld [vmem:[%s4 + $0x30] sm:$0xf]
    %v52 = vld [vmem:[%s4 + $0x34] sm:$0xf]
    %v53 = vld [vmem:[%s4 + $0x38] sm:$0xf]
    %v54 = vld [vmem:[%s4 + $0x3c] sm:$0xf]
    %v55 = vpack.c.bf16 %v26, %v25
    %v56 = vperm.slane %v29, 0
    %v61 = vunpack.c.l.b16 %v31
    %v62 = vunpack.c.l.b16 %v32
    %v63 = vunpack.c.l.b16 %v33
    %v64 = vunpack.c.l.b16 %v34
    %v65 = vpack.c.b16 %v62, %v61
    %v66 = vpack.c.b16 %v64, %v63
    %vm69 = vcmask 261120
    %v71 = vsel %vm69, %v55, 0
    %73 = vmatpush.bf16.msra.mxu0 0
    %74 = vmatpush.bf16.msra.mxu0 0
    %75 = vmatpush.bf16.msra.mxu0 0
    %76 = vmatpush.bf16.msra.mxu0 0
    %77 = vmatpush.bf16.msra.mxu0 0
    %78 = vmatpush.bf16.msra.mxu0 0
    %79 = vmatpush.bf16.msra.mxu0 %v66
    %80 = vmatpush.bf16.msra.mxu0 %v65
    %81 = vmatmul.bf16.gmra.mxu0 %v71
    %v82 = vpop.f32.mrf.mxu0
    %v83 = vadd.f32 %v56, %v82
    %v84 = vpop.f32.mrf.mxu0
    %v85 = vadd.f32 %v56, %v84
    %86 = vdwg.mxu0
    %v87 = vperm.slane %v29, 1
    %v90 = vunpack.c.l.b16 %v27
    %v91 = vunpack.c.l.b16 %v28
    %v92 = vpack.c.b16 %v91, %v90
    %93 = vrot.lane.b32.xlu0 %v65, 96
    %v94 = vpop.permute.xlu0 %93
    %95 = vrot.lane.b32.xlu0 %v66, 96
    %v96 = vpop.permute.xlu0 %95
    %v100 = vsel %vm69, %v92, 0
    %102 = vmatpush.bf16.msra.mxu0 0
    %103 = vmatpush.bf16.msra.mxu0 0
    %104 = vmatpush.bf16.msra.mxu0 0
    %105 = vmatpush.bf16.msra.mxu0 0
    %106 = vmatpush.bf16.msra.mxu0 0
    %107 = vmatpush.bf16.msra.mxu0 0
    %108 = vmatpush.bf16.msra.mxu0 %v96
    %109 = vmatpush.bf16.msra.mxu0 %v94
    %110 = vmatmul.bf16.gmra.mxu0 %v100
    %v111 = vpop.f32.mrf.mxu0
    %v112 = vadd.f32 %v87, %v111
    %v113 = vpop.f32.mrf.mxu0
    %v114 = vadd.f32 %v87, %v113
    %115 = vdwg.mxu0
    %v116 = vperm.slane %v29, 2
    %117 = vrot.lane.b32.xlu0 %v65, 64
    %v118 = vpop.permute.xlu0 %117
    %119 = vrot.lane.b32.xlu0 %v66, 64
    %v120 = vpop.permute.xlu0 %119
    %123 = vmatpush.bf16.msra.mxu0 0
    %124 = vmatpush.bf16.msra.mxu0 0
    %125 = vmatpush.bf16.msra.mxu0 0
    %126 = vmatpush.bf16.msra.mxu0 0
    %127 = vmatpush.bf16.msra.mxu0 0
    %128 = vmatpush.bf16.msra.mxu0 0
    %129 = vmatpush.bf16.msra.mxu0 %v120
    %130 = vmatpush.bf16.msra.mxu0 %v118
    %131 = vmatmul.bf16.gmra.mxu0 %v100
    %v132 = vpop.f32.mrf.mxu0
    %v133 = vadd.f32 %v116, %v132
    %v134 = vpop.f32.mrf.mxu0
    %v135 = vadd.f32 %v116, %v134
    %136 = vdwg.mxu0
    %v137 = vpack.c.bf16 %v112, %v112
    %v138 = vpack.c.bf16 %v114, %v114
    %v139 = vunpack.c.l.bf16 %v137
    %v140 = vunpack.c.l.bf16 %v138
    %v141 = vunpack.c.l.bf16 %v47
    %v142 = vunpack.c.l.bf16 %v48
    %v143 = vunpack.c.l.bf16 %v49
    %v144 = vunpack.c.l.bf16 %v50
    %v145 = vunpack.c.l.bf16 %v51
    %v146 = vunpack.c.l.bf16 %v52
    %v147 = vunpack.c.l.bf16 %v53
    %v148 = vunpack.c.l.bf16 %v54
    %v149 = vmul.f32 %v139, %v141
    %v150 = vmul.f32 %v140, %v142
    %v151 = vmul.f32 %v139, %v143
    %v152 = vmul.f32 %v140, %v144
    %v153 = vmul.f32 %v139, %v145
    %v154 = vmul.f32 %v140, %v146
    %v155 = vmul.f32 %v139, %v147
    %v156 = vmul.f32 %v140, %v148
    %v157 = vpack.c.bf16 %v150, %v149
    %v158 = vpack.c.bf16 %v152, %v151
    %v159 = vpack.c.bf16 %v154, %v153
    %v160 = vpack.c.bf16 %v156, %v155
    %v161 = vpack.c.bf16 %v133, %v133
    %v162 = vpack.c.bf16 %v135, %v135
    %v163 = vunpack.c.l.bf16 %v161
    %v164 = vunpack.c.l.bf16 %v162
    %v165 = vmul.f32 %v163, %v141
    %v166 = vmul.f32 %v164, %v142
    %v167 = vmul.f32 %v163, %v143
    %v168 = vmul.f32 %v164, %v144
    %v169 = vmul.f32 %v163, %v145
    %v170 = vmul.f32 %v164, %v146
    %v171 = vmul.f32 %v163, %v147
    %v172 = vmul.f32 %v164, %v148
    %v173 = vpack.c.bf16 %v166, %v165
    %v174 = vpack.c.bf16 %v168, %v167
    %v175 = vpack.c.bf16 %v170, %v169
    %v176 = vpack.c.bf16 %v172, %v171
    %v177 = vpack.c.bf16 %v85, %v83
    %v178 = vld [vmem:[%s2] sm:$0xff]
    %v179 = vld [vmem:[%s2 + $0x8] sm:$0xff]
    %181 = vset.pattern.permute.xlu0 0
    %182 = vperm.xlu0 %181, %v178
    %v183 = vpop.permute.xlu0 %182
    %186 = vset.pattern.permute.xlu0 0
    %187 = vperm.xlu0 %186, %v179
    %v188 = vpop.permute.xlu0 %187
    %v190 = vperm.slane %v30, 4
    %vm191 = vcmp.eq.f32.partialorder %v183, %v190
    %vm192 = vcmp.eq.f32.partialorder %v188, %v190
    %v193 = vsel %vm191, 0.0, -30000.0
    %v194 = vsel %vm192, 0.0, -30000.0
    %v196 = vsel %vm69, %v177, 0
    %v199 = vsel %vm69, %v157, 0
    %v202 = vsel %vm69, %v158, 0
    %v205 = vsel %vm69, %v159, 0
    %v208 = vsel %vm69, %v160, 0
    %210 = vmatpush.bf16.xpose.msra.mxu0 0
    %211 = vmatpush.bf16.xpose.msra.mxu0 0
    %212 = vmatpush.bf16.xpose.msra.mxu0 0
    %213 = vmatpush.bf16.xpose.msra.mxu0 0
    %214 = vmatpush.bf16.xpose.msra.mxu0 %v208
    %215 = vmatpush.bf16.xpose.msra.mxu0 %v205
    %216 = vmatpush.bf16.xpose.msra.mxu0 %v202
    %217 = vmatpush.bf16.xpose.msra.mxu0 %v199
    %218 = vmatmul.bf16.gmra.mxu0 %v196
    %v219 = vpop.f32.mrf.mxu0
    %v220 = vadd.f32 %v193, %v219
    %v221 = vpop.f32.mrf.mxu0
    %v222 = vadd.f32 %v194, %v221
    %223 = vdwg.mxu0
    %vm224 = vcmask 523264
    %v225 = vsel %vm224, %v220, -inf
    %226 = vmax.xlane.f32.xlu0 %v225
    %v227 = vpop.xlane.xlu0 %226
    %v228 = vsel %vm224, %v222, -inf
    %229 = vmax.xlane.f32.xlu0 %v228
    %v230 = vpop.xlane.xlu0 %229
    %v231 = vsub.f32 %v220, %v227
    %v232 = vsub.f32 %v222, %v230
    %v233 = vmul.f32 %v231, 1.442695
    %v234 = vpow.pop %v233
    %v235 = vmul.f32 %v232, 1.442695
    %v236 = vpow.pop %v235
    %v237 = vpack.c.bf16 %v236, %v234
    %v239 = vsel %vm224, %v237, 0
    %241 = vmatpush.bf16.msra.mxu0 0
    %242 = vmatpush.bf16.msra.mxu0 0
    %243 = vmatpush.bf16.msra.mxu0 0
    %244 = vmatpush.bf16.msra.mxu0 0
    %245 = vmatpush.bf16.msra.mxu0 %v176
    %246 = vmatpush.bf16.msra.mxu0 %v175
    %247 = vmatpush.bf16.msra.mxu0 %v174
    %248 = vmatpush.bf16.msra.mxu0 %v173
    %249 = vmatmul.bf16.gmra.mxu0 %v239
    %v250 = vpop.f32.mrf.mxu0
    %v251 = vadd.f32 0.0, %v250
    %v252 = vpop.f32.mrf.mxu0
    %v253 = vadd.f32 0.0, %v252
    %254 = vdwg.mxu0
    %v263 = vunpack.c.l.b16 %v47
    %v264 = vunpack.c.l.b16 %v48
    %v265 = vunpack.c.l.b16 %v49
    %v266 = vunpack.c.l.b16 %v50
    %v267 = vunpack.c.l.b16 %v51
    %v268 = vunpack.c.l.b16 %v52
    %v269 = vunpack.c.l.b16 %v53
    %v270 = vunpack.c.l.b16 %v54
    %v271 = vpack.c.b16 %v264, %v263
    %v272 = vpack.c.b16 %v266, %v265
    %v273 = vpack.c.b16 %v268, %v267
    %v274 = vpack.c.b16 %v270, %v269
    %279 = vmatpush.bf16.msra.mxu0 0
    %280 = vmatpush.bf16.msra.mxu0 0
    %281 = vmatpush.bf16.msra.mxu0 0
    %282 = vmatpush.bf16.msra.mxu0 0
    %283 = vmatpush.bf16.msra.mxu0 %v274
    %284 = vmatpush.bf16.msra.mxu0 %v273
    %285 = vmatpush.bf16.msra.mxu0 %v272
    %286 = vmatpush.bf16.msra.mxu0 %v271
    %287 = vmatmul.bf16.gmra.mxu0 %v239
    %v288 = vpop.f32.mrf.mxu0
    %v289 = vadd.f32 0.0, %v288
    %v290 = vpop.f32.mrf.mxu0
    %v291 = vadd.f32 0.0, %v290
    %292 = vdwg.mxu0
    %v293 = vrcp.pop %v289
    %v294 = vrcp.pop %v291
    %v295 = vmul.f32 %v251, %v293
    %v296 = vmul.f32 %v253, %v294
    %v297 = vpack.c.bf16 %v296, %v295
    %v298 = vperm.slane %v29, 3
    %299 = vrot.lane.b32.xlu0 %v65, 32
    %v300 = vpop.permute.xlu0 %299
    %301 = vrot.lane.b32.xlu0 %v66, 32
    %v302 = vpop.permute.xlu0 %301
    %v306 = vsel %vm69, %v297, 0
    %308 = vmatpush.bf16.msra.mxu0 0
    %309 = vmatpush.bf16.msra.mxu0 0
    %310 = vmatpush.bf16.msra.mxu0 0
    %311 = vmatpush.bf16.msra.mxu0 0
    %312 = vmatpush.bf16.msra.mxu0 0
    %313 = vmatpush.bf16.msra.mxu0 0
    %314 = vmatpush.bf16.msra.mxu0 %v302
    %315 = vmatpush.bf16.msra.mxu0 %v300
    %316 = vmatmul.bf16.gmra.mxu0 %v306
    %v317 = vpop.f32.mrf.mxu0
    %v318 = vadd.f32 %v298, %v317
    %v319 = vpop.f32.mrf.mxu0
    %v320 = vadd.f32 %v298, %v319
    %321 = vdwg.mxu0
    %v322 = vadd.f32 %v25, %v318
    %v323 = vadd.f32 %v26, %v320
    %v324 = vsel %vm69, %v322, 0.0
    %325 = vadd.xlane.f32.xlu0 %v324
    %v326 = vpop.xlane.xlu0 %325
    %v327 = vsel %vm69, %v323, 0.0
    %328 = vadd.xlane.f32.xlu0 %v327
    %v329 = vpop.xlane.xlu0 %328
    %v330 = vrcp.pop 32.0
    %v331 = vmul.f32 32.0, %v330
    %v332 = vsub.f32 1.0, %v331
    %v333 = vmul.f32 %v330, %v332
    %v334 = vadd.f32 %v330, %v333
    %vm335 = vweird.f32 %v330
    %v336 = vsel %vm335, %v330, %v334
    %v337 = vmul.f32 %v326, %v336
    %v338 = vmul.f32 %v329, %v336
    %v339 = vsub.f32 %v322, %v337
    %v340 = vsub.f32 %v323, %v338
    %v341 = vmul.f32 %v339, %v339
    %v342 = vmul.f32 %v340, %v340
    %v343 = vsel %vm69, %v341, 0.0
    %344 = vadd.xlane.f32.xlu0 %v343
    %v345 = vpop.xlane.xlu0 %344
    %v346 = vsel %vm69, %v342, 0.0
    %347 = vadd.xlane.f32.xlu0 %v346
    %v348 = vpop.xlane.xlu0 %347
    %v349 = vmul.f32 %v345, %v336
    %v350 = vmul.f32 %v348, %v336
    %v351 = vadd.f32 %v349, 1e-05
    %v352 = vadd.f32 %v350, 1e-05
    %v353 = vrsqrt.pop %v351
    %v354 = vmul.f32 %v353, %v351
    %v355 = vmul.f32 %v354, %v353
    %v356 = vmul.f32 0.5, %v355
    %v357 = vsub.f32 1.5, %v356
    %v358 = vmul.f32 %v353, %v357
    %vm359 = vweird.f32 %v351
    %vm360 = vweird.f32 %v353
    %vm361 = vmor %vm359, %vm360
    %v362 = vsel %vm361, %v353, %v358
    %v363 = vrsqrt.pop %v352
    %v364 = vmul.f32 %v363, %v352
    %v365 = vmul.f32 %v364, %v363
    %v366 = vmul.f32 0.5, %v365
    %v367 = vsub.f32 1.5, %v366
    %v368 = vmul.f32 %v363, %v367
    %vm369 = vweird.f32 %v352
    %vm370 = vweird.f32 %v363
    %vm371 = vmor %vm369, %vm370
    %v372 = vsel %vm371, %v363, %v368
    %v373 = vmul.f32 %v339, %v362
    %v374 = vmul.f32 %v340, %v372
    %v375 = vperm.slane %v29, 4
    %v376 = vmul.f32 %v373, %v375
    %v377 = vmul.f32 %v374, %v375
    %v378 = vperm.slane %v29, 5
    %v379 = vadd.f32 %v376, %v378
    %v380 = vadd.f32 %v377, %v378
    %v381 = vpack.c.bf16 %v380, %v379
    %v382 = vperm.slane %v29, 6
    %v387 = vunpack.c.l.b16 %v35
    %v388 = vunpack.c.l.b16 %v36
    %v389 = vunpack.c.l.b16 %v37
    %v390 = vunpack.c.l.b16 %v38
    %v391 = vpack.c.b16 %v388, %v387
    %v392 = vpack.c.b16 %v390, %v389
    %v396 = vsel %vm69, %v381, 0
    %398 = vmatpush.bf16.msra.mxu0 0
    %399 = vmatpush.bf16.msra.mxu0 0
    %400 = vmatpush.bf16.msra.mxu0 0
    %401 = vmatpush.bf16.msra.mxu0 0
    %402 = vmatpush.bf16.msra.mxu0 0
    %403 = vmatpush.bf16.msra.mxu0 0
    %404 = vmatpush.bf16.msra.mxu0 %v392
    %405 = vmatpush.bf16.msra.mxu0 %v391
    %406 = vmatmul.bf16.gmra.mxu0 %v396
    %v407 = vpop.f32.mrf.mxu0
    %v408 = vadd.f32 %v382, %v407
    %v409 = vpop.f32.mrf.mxu0
    %v410 = vadd.f32 %v382, %v409
    %411 = vdwg.mxu0
    %v412 = vmax.f32 %v408, 0.0
    %v413 = vmax.f32 %v410, 0.0
    %v414 = vpack.c.bf16 %v413, %v412
    %v415 = vperm.slane %v29, 7
    %v424 = vunpack.c.l.b16 %v39
    %v425 = vunpack.c.l.b16 %v40
    %v426 = vunpack.c.l.b16 %v41
    %v427 = vunpack.c.l.b16 %v42
    %v428 = vunpack.c.l.b16 %v43
    %v429 = vunpack.c.l.b16 %v44
    %v430 = vunpack.c.l.b16 %v45
    %v431 = vunpack.c.l.b16 %v46
    %v432 = vpack.c.b16 %v425, %v424
    %v433 = vpack.c.b16 %v427, %v426
    %v434 = vpack.c.b16 %v429, %v428
    %v435 = vpack.c.b16 %v431, %v430
    %v441 = vsel %vm224, %v414, 0
    %443 = vmatpush.bf16.msra.mxu0 0
    %444 = vmatpush.bf16.msra.mxu0 0
    %445 = vmatpush.bf16.msra.mxu0 0
    %446 = vmatpush.bf16.msra.mxu0 0
    %447 = vmatpush.bf16.msra.mxu0 %v435
    %448 = vmatpush.bf16.msra.mxu0 %v434
    %449 = vmatpush.bf16.msra.mxu0 %v433
    %450 = vmatpush.bf16.msra.mxu0 %v432
    %451 = vmatmul.bf16.gmra.mxu0 %v441
    %v452 = vpop.f32.mrf.mxu0
    %v453 = vadd.f32 %v415, %v452
    %v454 = vpop.f32.mrf.mxu0
    %v455 = vadd.f32 %v415, %v454
    %456 = vdwg.mxu0
    %v457 = vadd.f32 %v453, %v379
    %v458 = vadd.f32 %v455, %v380
    %v459 = vsel %vm69, %v457, 0.0
    %460 = vadd.xlane.f32.xlu0 %v459
    %v461 = vpop.xlane.xlu0 %460
    %v462 = vsel %vm69, %v458, 0.0
    %463 = vadd.xlane.f32.xlu0 %v462
    %v464 = vpop.xlane.xlu0 %463
    %v465 = vmul.f32 %v461, %v336
    %v466 = vmul.f32 %v464, %v336
    %v467 = vsub.f32 %v457, %v465
    %v468 = vsub.f32 %v458, %v466
    %v469 = vmul.f32 %v467, %v467
    %v470 = vmul.f32 %v468, %v468
    %v471 = vsel %vm69, %v469, 0.0
    %472 = vadd.xlane.f32.xlu0 %v471
    %v473 = vpop.xlane.xlu0 %472
    %v474 = vsel %vm69, %v470, 0.0
    %475 = vadd.xlane.f32.xlu0 %v474
    %v476 = vpop.xlane.xlu0 %475
    %v477 = vmul.f32 %v473, %v336
    %v478 = vmul.f32 %v476, %v336
    %v479 = vadd.f32 %v477, 1e-05
    %v480 = vadd.f32 %v478, 1e-05
    %v481 = vrsqrt.pop %v479
    %v482 = vmul.f32 %v481, %v479
    %v483 = vmul.f32 %v482, %v481
    %v484 = vmul.f32 0.5, %v483
    %v485 = vsub.f32 1.5, %v484
    %v486 = vmul.f32 %v481, %v485
    %vm487 = vweird.f32 %v479
    %vm488 = vweird.f32 %v481
    %vm489 = vmor %vm487, %vm488
    %v490 = vsel %vm489, %v481, %v486
    %v491 = vrsqrt.pop %v480
    %v492 = vmul.f32 %v491, %v480
    %v493 = vmul.f32 %v492, %v491
    %v494 = vmul.f32 0.5, %v493
    %v495 = vsub.f32 1.5, %v494
    %v496 = vmul.f32 %v491, %v495
    %vm497 = vweird.f32 %v480
    %vm498 = vweird.f32 %v491
    %vm499 = vmor %vm497, %vm498
    %v500 = vsel %vm499, %v491, %v496
    %v501 = vmul.f32 %v467, %v490
    %v502 = vmul.f32 %v468, %v500
    %v503 = vperm.slane %v30, 0
    %v504 = vmul.f32 %v501, %v503
    %v505 = vmul.f32 %v502, %v503
    %v506 = vperm.slane %v30, 1
    %v507 = vadd.f32 %v504, %v506
    %v508 = vadd.f32 %v505, %v506
    %v509 = vsel %vm69, %v507, 0.0
    %510 = vadd.xlane.f32.xlu0 %v509
    %v511 = vpop.xlane.xlu0 %510
    %v512 = vsel %vm69, %v508, 0.0
    %513 = vadd.xlane.f32.xlu0 %v512
    %v514 = vpop.xlane.xlu0 %513
    %v515 = vmul.f32 %v511, %v336
    %v516 = vmul.f32 %v514, %v336
    %v517 = vsub.f32 %v507, %v515
    %v518 = vsub.f32 %v508, %v516
    %v519 = vmul.f32 %v517, %v517
    %v520 = vmul.f32 %v518, %v518
    %v521 = vsel %vm69, %v519, 0.0
    %522 = vadd.xlane.f32.xlu0 %v521
    %v523 = vpop.xlane.xlu0 %522
    %v524 = vsel %vm69, %v520, 0.0
    %525 = vadd.xlane.f32.xlu0 %v524
    %v526 = vpop.xlane.xlu0 %525
    %v527 = vmul.f32 %v523, %v336
    %v528 = vmul.f32 %v526, %v336
    %v529 = vadd.f32 %v527, 1e-05
    %v530 = vadd.f32 %v528, 1e-05
    %v531 = vrsqrt.pop %v529
    %v532 = vmul.f32 %v531, %v529
    %v533 = vmul.f32 %v532, %v531
    %v534 = vmul.f32 0.5, %v533
    %v535 = vsub.f32 1.5, %v534
    %v536 = vmul.f32 %v531, %v535
    %vm537 = vweird.f32 %v529
    %vm538 = vweird.f32 %v531
    %vm539 = vmor %vm537, %vm538
    %v540 = vsel %vm539, %v531, %v536
    %v541 = vrsqrt.pop %v530
    %v542 = vmul.f32 %v541, %v530
    %v543 = vmul.f32 %v542, %v541
    %v544 = vmul.f32 0.5, %v543
    %v545 = vsub.f32 1.5, %v544
    %v546 = vmul.f32 %v541, %v545
    %vm547 = vweird.f32 %v530
    %vm548 = vweird.f32 %v541
    %vm549 = vmor %vm547, %vm548
    %v550 = vsel %vm549, %v541, %v546
    %v551 = vmul.f32 %v517, %v540
    %v552 = vmul.f32 %v518, %v550
    %v553 = vperm.slane %v30, 2
    %v554 = vmul.f32 %v551, %v553
    %v555 = vmul.f32 %v552, %v553
    %v556 = vperm.slane %v30, 3
    %v557 = vadd.f32 %v554, %v556
    %v558 = vadd.f32 %v555, %v556
    %559 = vst.msk [vmem:[#allocation2] sm:$0xff] %vm69, %v557
    %560 = vst.msk [vmem:[#allocation2 + $0x8] sm:$0xff] %vm69, %v558
    // Predicated region
    $region26: #{tpu_custom_call.1} parent=1 // pred_check
      _
    $region27: #{tpu_custom_call.1} parent=1 // pred_check_branch
      %562 = sbr.rel (0) target = $region29
    $region28: #{tpu_custom_call.1} parent=1 // pred_region
      %564 = vsyncadd [#allocation3], 0
      %s565 = sshll.u32 [#allocation2], 4
      %s566 = int_to_ptr.vmem [resolvable:$true] %s565
      %s567 = sshll.u32 %s6, 4
      %s568 = int_to_ptr.hbm [resolvable:$true] %s567
      %573 = dma.vmem_to_hbm [thread:$0]  %s566, 256, %s568, [#allocation3], 128, 128, 8
    $region29: #{tpu_custom_call.1} parent=1 // pred_fallthru
      _
    // Predicated region
    $region30: #{tpu_custom_call.1} parent=1 // pred_check
      _
    $region31: #{tpu_custom_call.1} parent=1 // pred_check_branch
      %575 = sbr.rel (0) target = $region33
    $region32: #{tpu_custom_call.1} parent=1 // pred_region
      %577 = dma.done [#allocation3], 256
    $region33: #{tpu_custom_call.1} parent=1 // pred_fallthru
      _
    %578 = vsyncpa [#allocation3], 1

</llo_original>
